<compile_context>
chip_gen: v5e
topology: v5e:2x2
jax: 0.10.0
libtpu: 0.0.40
codegen_flags: <defaults>
</compile_context>

<pallas_src>
import functools

import jax
import jax.numpy as jnp
from jax.experimental import pallas as pl
from jax.experimental.pallas import tpu as pltpu


def _reflect_pad_lanedense(xb, H, W, C):
    """ReflectionPad2d(1) on a (H, W*C) lane-dense image -> (H+2, (W+2)*C)."""
    WC = W * C
    # Width pad: [col1, col0..colW-1, colW-2] along the lane axis.
    row = jnp.concatenate(
        [xb[:, C:2 * C], xb, xb[:, WC - 2 * C:WC - C]], axis=1)   # (H, (W+2)*C)
    # Height pad: [row1, row0..rowH-1, rowH-2] (corners come along for free).
    return jnp.concatenate([row[1:2, :], row, row[H - 2:H - 1, :]], axis=0)


def _residual_block_kernel(x_ref, w1_ref, w2_ref, bias_ref, out_ref, *, H, W, C):
    """Fused reflect-pad -> conv3x3(+BN scale folded) -> +bias -> SiLU ->
    reflect-pad -> conv3x3(+BN scale folded) -> +bias -> +x.

    x_ref:    (1, H, W*C) f32   input block (also the residual)
    w1_ref:   (3, (W+2)*C, W*C) banded conv1 weights (matmul dtype, BN1 scale folded)
    w2_ref:   (3, (W+2)*C, W*C) banded conv2 weights (matmul dtype, BN2 scale folded)
    bias_ref: (2, W*C) f32      rows = [bias1 tiled over W, bias2 tiled over W]
    out_ref:  (1, H, W*C)
    """
    WC = W * C
    cdt = w1_ref.dtype                         # matmul dtype (bf16 by default)
    x = x_ref[0]                               # (H, W*C), f32

    b1 = bias_ref[0:1, :]                      # (1, W*C) f32
    b2 = bias_ref[1:2, :]

    # ---- conv1: reflect-pad in VMEM, 3 banded MXU matmuls, f32 accumulation ----
    xpad = _reflect_pad_lanedense(x.astype(cdt), H, W, C)      # (H+2, (W+2)*C)
    acc = jnp.zeros((H, WC), jnp.float32)
    for dy in range(3):
        acc = acc + jnp.dot(xpad[dy:dy + H, :], w1_ref[dy],
                            preferred_element_type=jnp.float32)
    y = acc + b1
    y = y * jax.nn.sigmoid(y)                  # SiLU, f32 (EUP)

    # ---- conv2: intermediate never leaves VMEM ----
    ypad = _reflect_pad_lanedense(y.astype(cdt), H, W, C)
    acc2 = jnp.zeros((H, WC), jnp.float32)
    for dy in range(3):
        acc2 = acc2 + jnp.dot(ypad[dy:dy + H, :], w2_ref[dy],
                              preferred_element_type=jnp.float32)

    # ---- bias + residual, one lane-dense store ----
    out_ref[0] = (acc2 + b2 + x).astype(out_ref.dtype)


def _fold_bn_and_band(w_hwio, scale, W, C, dtype):
    """Fold BN scale into HWIO weights (f32) and build the banded matmul weights.

    Returns (3, (W+2)*C, W*C) with
      banded[dy, (wo+dx)*C + ci, wo*C + co] = w[dy, dx, ci, co] * scale[co].
    """
    wf = w_hwio.astype(jnp.float32) * scale.astype(jnp.float32)[None, None, None, :]
    shift = jnp.zeros((3, W, W + 2), jnp.float32)
    cols = jnp.arange(W)
    for dx in range(3):
        shift = shift.at[dx, cols, cols + dx].set(1.0)
    banded = jnp.einsum("xwj,yxio->yjiwo", shift, wf)          # (3, W+2, C, W, C)
    return banded.reshape(3, (W + 2) * C, W * C).astype(dtype)


def residual_block_packed(x, w1, s1, b1, w2, s2, b2, *, H, W, C,
                          matmul_dtype=jnp.bfloat16):
    """x: (N, H, W*C) f32, channels innermost.  Returns x + conv_block(x)."""
    assert H >= 2 and W >= 2, "ReflectionPad2d(1) requires H >= 2 and W >= 2"
    N = x.shape[0]
    WC, KP = W * C, (W + 2) * C

    w1b = _fold_bn_and_band(w1, s1, W, C, matmul_dtype)
    w2b = _fold_bn_and_band(w2, s2, W, C, matmul_dtype)
    bias = jnp.stack([jnp.tile(b1, W), jnp.tile(b2, W)]).astype(jnp.float32)  # (2, WC)

    kernel = functools.partial(_residual_block_kernel, H=H, W=W, C=C)
    return pl.pallas_call(
        kernel,
        out_shape=jax.ShapeDtypeStruct((N, H, WC), x.dtype),
        grid=(N,),
        in_specs=[
            pl.BlockSpec((1, H, WC), lambda n: (n, 0, 0)),     # x (and residual)
            pl.BlockSpec((3, KP, WC), lambda n: (0, 0, 0)),    # banded conv1 weights
            pl.BlockSpec((3, KP, WC), lambda n: (0, 0, 0)),    # banded conv2 weights
            pl.BlockSpec((2, WC), lambda n: (0, 0)),           # [bias1, bias2]
        ],
        out_specs=pl.BlockSpec((1, H, WC), lambda n: (n, 0, 0)),
        compiler_params=pltpu.CompilerParams(
            dimension_semantics=("parallel",)),
    )(x, w1b, w2b, bias)


def residual_block_nhwc(x_nhwc, w1, s1, b1, w2, s2, b2, *, matmul_dtype=jnp.bfloat16):
    """x: (N,H,W,C).  The (N,H,W,C)->(N,H,W*C) repack is a free reshape."""
    N, H, W, C = x_nhwc.shape
    out = residual_block_packed(x_nhwc.reshape(N, H, W * C), w1, s1, b1, w2, s2, b2,
                                H=H, W=W, C=C, matmul_dtype=matmul_dtype)
    return out.reshape(N, H, W, C)


def residual_block_nchw(x_nchw, w1, s1, b1, w2, s2, b2, *, matmul_dtype=jnp.bfloat16):
    # Boundary glue for PyTorch NCHW convention only; a production pipeline should
    # stay in the lane-dense NHWC layout end-to-end (each transpose is a full
    # HBM round trip).
    x = jnp.transpose(x_nchw, (0, 2, 3, 1))          # NCHW -> NHWC
    out = residual_block_nhwc(x, w1, s1, b1, w2, s2, b2, matmul_dtype=matmul_dtype)
    return jnp.transpose(out, (0, 3, 1, 2))          # NHWC -> NCHW


def _reference_nhwc(x, w1, s1, b1, w2, s2, b2, *, matmul_dtype=jnp.float32):
    """Pure-JAX reference.  With matmul_dtype=bf16 it matches the kernel's
    precision (BN scale folded in f32, bf16 conv inputs, f32 accumulation); with
    f32 it is the exact module math."""
    def conv_bn(inp, w, s, b):
        wf = (w.astype(jnp.float32) * s[None, None, None, :]).astype(matmul_dtype)
        ipad = jnp.pad(inp, ((0, 0), (1, 1), (1, 1), (0, 0)), mode="reflect")
        y = jax.lax.conv_general_dilated(
            ipad.astype(matmul_dtype), wf, window_strides=(1, 1), padding="VALID",
            dimension_numbers=("NHWC", "HWIO", "NHWC"),
            preferred_element_type=jnp.float32)
        return y + b
    y = conv_bn(x, w1, s1, b1)
    y = y * jax.nn.sigmoid(y)
    y = conv_bn(y, w2, s2, b2)
    return x + y


if __name__ == "__main__":
    N, C, H, W = 2, 4, 16, 16
    eps = 1e-5
    key = jax.random.PRNGKey(0)
    ks = jax.random.split(key, 16)

    # Input in PyTorch NCHW convention.
    x_nchw = jax.random.normal(ks[0], (N, C, H, W), jnp.float32)

    def make_params(kw, kb, kg, kbe, km, kv):
        w = 0.1 * jax.random.normal(kw, (3, 3, C, C), jnp.float32)   # HWIO
        conv_b = 0.1 * jax.random.normal(kb, (C,), jnp.float32)
        gamma = 1.0 + 0.1 * jax.random.normal(kg, (C,), jnp.float32)
        beta = 0.05 * jax.random.normal(kbe, (C,), jnp.float32)
        rmean = 0.1 * jax.random.normal(km, (C,), jnp.float32)
        rvar = 0.5 + jnp.abs(jax.random.normal(kv, (C,), jnp.float32))
        scale = gamma / jnp.sqrt(rvar + eps)
        bias = beta + scale * (conv_b - rmean)   # fold conv bias + BN (eval mode)
        return w, scale, bias

    w1, s1, b1 = make_params(*ks[1:7])
    w2, s2, b2 = make_params(*ks[7:13])

    out = residual_block_nchw(x_nchw, w1, s1, b1, w2, s2, b2)
    out = jax.block_until_ready(out)
    assert out.shape == x_nchw.shape

    x_nhwc = jnp.transpose(x_nchw, (0, 2, 3, 1))

    # (1) precision-matched reference (bf16 conv inputs, f32 accumulation): tight.
    ref_bf16 = _reference_nhwc(x_nhwc, w1, s1, b1, w2, s2, b2,
                               matmul_dtype=jnp.bfloat16)
    ref_bf16 = jnp.transpose(ref_bf16, (0, 3, 1, 2))
    assert jnp.allclose(out, ref_bf16, rtol=1e-3, atol=1e-3), \
        "mismatch vs precision-matched (bf16) reference"

    # (2) full-f32 reference (exact module math): loose, bounds the bf16 error.
    ref_f32 = _reference_nhwc(x_nhwc, w1, s1, b1, w2, s2, b2,
                              matmul_dtype=jnp.float32)
    ref_f32 = jnp.transpose(ref_f32, (0, 3, 1, 2))
    assert jnp.allclose(out, ref_f32, rtol=3e-2, atol=3e-2), \
        "mismatch vs f32 reference"

    print("KERNEL_OK")
</pallas_src>

<mosaic_0001>
module attributes {stable_mosaic.version = 11 : i64} {
  func.func @_residual_block_kernel(%arg0: i32, %arg1: memref<1x16x64xf32, #tpu.memory_space<vmem>>, %arg2: memref<3x72x64xbf16, #tpu.memory_space<vmem>>, %arg3: memref<3x72x64xbf16, #tpu.memory_space<vmem>>, %arg4: memref<2x64xf32, #tpu.memory_space<vmem>>, %arg5: memref<1x16x64xf32, #tpu.memory_space<vmem>>) attributes {dimension_semantics = [#tpu.dimension_semantics<parallel>], iteration_bounds = array<i64: 2>, scalar_prefetch = 0 : i64, scratch_operands = 0 : i64, tpu.core_type = #tpu.core_type<tc>, window_params = [{transform_indices = @transform_0, window_bounds = array<i64: 1, 16, 64>}, {pipeline_mode = #tpu.pipeline_mode<synchronous>, transform_indices = @transform_1, window_bounds = array<i64: 3, 72, 64>}, {pipeline_mode = #tpu.pipeline_mode<synchronous>, transform_indices = @transform_2, window_bounds = array<i64: 3, 72, 64>}, {pipeline_mode = #tpu.pipeline_mode<synchronous>, transform_indices = @transform_3, window_bounds = array<i64: 2, 64>}, {transform_indices = @transform_4, window_bounds = array<i64: 1, 16, 64>}]} {
    %c0 = arith.constant 0 : index
    %c0_0 = arith.constant 0 : index
    %c0_1 = arith.constant 0 : index
    %0 = vector.load %arg1[%c0, %c0_0, %c0_1] : memref<1x16x64xf32, #tpu.memory_space<vmem>>, vector<1x16x64xf32>
    %1 = vector.shape_cast %0 : vector<1x16x64xf32> to vector<16x64xf32>
    %c0_2 = arith.constant 0 : index
    %c0_3 = arith.constant 0 : index
    %2 = vector.load %arg4[%c0_2, %c0_3] : memref<2x64xf32, #tpu.memory_space<vmem>>, vector<1x64xf32>
    %c1 = arith.constant 1 : index
    %c0_4 = arith.constant 0 : index
    %3 = vector.load %arg4[%c1, %c0_4] : memref<2x64xf32, #tpu.memory_space<vmem>>, vector<1x64xf32>
    %4 = arith.truncf %1 : vector<16x64xf32> to vector<16x64xbf16>
    %5 = vector.extract_strided_slice %4 {offsets = [0, 4], sizes = [16, 4], strides = [1, 1]} : vector<16x64xbf16> to vector<16x4xbf16>
    %6 = vector.extract_strided_slice %4 {offsets = [0, 56], sizes = [16, 4], strides = [1, 1]} : vector<16x64xbf16> to vector<16x4xbf16>
    %7 = tpu.concatenate %5, %4, %6 in 1 : vector<16x4xbf16>, vector<16x64xbf16>, vector<16x4xbf16> -> vector<16x72xbf16>
    %8 = vector.extract_strided_slice %7 {offsets = [1, 0], sizes = [1, 72], strides = [1, 1]} : vector<16x72xbf16> to vector<1x72xbf16>
    %9 = vector.extract_strided_slice %7 {offsets = [14, 0], sizes = [1, 72], strides = [1, 1]} : vector<16x72xbf16> to vector<1x72xbf16>
    %10 = tpu.concatenate %8, %7, %9 in 0 : vector<1x72xbf16>, vector<16x72xbf16>, vector<1x72xbf16> -> vector<18x72xbf16>
    %cst = arith.constant 0.000000e+00 : f32
    %11 = vector.broadcast %cst : f32 to vector<16x64xf32>
    %12 = vector.extract_strided_slice %10 {offsets = [0, 0], sizes = [16, 72], strides = [1, 1]} : vector<18x72xbf16> to vector<16x72xbf16>
    %c0_5 = arith.constant 0 : index
    %c0_6 = arith.constant 0 : index
    %c0_7 = arith.constant 0 : index
    %13 = vector.load %arg2[%c0_5, %c0_6, %c0_7] : memref<3x72x64xbf16, #tpu.memory_space<vmem>>, vector<1x72x64xbf16>
    %14 = vector.shape_cast %13 : vector<1x72x64xbf16> to vector<72x64xbf16>
    %cst_8 = arith.constant dense<0.000000e+00> : vector<16x64xf32>
    %15 = tpu.matmul %12, %14, %cst_8 {dimension_numbers = #tpu.dot_dimension_numbers<[1], [0], [0], [1], [0, 0, 1, 1], [], []>} : vector<16x72xbf16>, vector<72x64xbf16>, vector<16x64xf32> -> vector<16x64xf32>
    %16 = arith.addf %11, %15 : vector<16x64xf32>
    %17 = vector.extract_strided_slice %10 {offsets = [1, 0], sizes = [16, 72], strides = [1, 1]} : vector<18x72xbf16> to vector<16x72xbf16>
    %c1_9 = arith.constant 1 : index
    %c0_10 = arith.constant 0 : index
    %c0_11 = arith.constant 0 : index
    %18 = vector.load %arg2[%c1_9, %c0_10, %c0_11] : memref<3x72x64xbf16, #tpu.memory_space<vmem>>, vector<1x72x64xbf16>
    %19 = vector.shape_cast %18 : vector<1x72x64xbf16> to vector<72x64xbf16>
    %cst_12 = arith.constant dense<0.000000e+00> : vector<16x64xf32>
    %20 = tpu.matmul %17, %19, %cst_12 {dimension_numbers = #tpu.dot_dimension_numbers<[1], [0], [0], [1], [0, 0, 1, 1], [], []>} : vector<16x72xbf16>, vector<72x64xbf16>, vector<16x64xf32> -> vector<16x64xf32>
    %21 = arith.addf %16, %20 : vector<16x64xf32>
    %22 = vector.extract_strided_slice %10 {offsets = [2, 0], sizes = [16, 72], strides = [1, 1]} : vector<18x72xbf16> to vector<16x72xbf16>
    %c2 = arith.constant 2 : index
    %c0_13 = arith.constant 0 : index
    %c0_14 = arith.constant 0 : index
    %23 = vector.load %arg2[%c2, %c0_13, %c0_14] : memref<3x72x64xbf16, #tpu.memory_space<vmem>>, vector<1x72x64xbf16>
    %24 = vector.shape_cast %23 : vector<1x72x64xbf16> to vector<72x64xbf16>
    %cst_15 = arith.constant dense<0.000000e+00> : vector<16x64xf32>
    %25 = tpu.matmul %22, %24, %cst_15 {dimension_numbers = #tpu.dot_dimension_numbers<[1], [0], [0], [1], [0, 0, 1, 1], [], []>} : vector<16x72xbf16>, vector<72x64xbf16>, vector<16x64xf32> -> vector<16x64xf32>
    %26 = arith.addf %21, %25 : vector<16x64xf32>
    %27 = vector.broadcast %2 : vector<1x64xf32> to vector<16x64xf32>
    %28 = arith.addf %26, %27 : vector<16x64xf32>
    %29 = arith.negf %28 : vector<16x64xf32>
    %30 = math.exp %29 : vector<16x64xf32>
    %cst_16 = arith.constant 1.000000e+00 : f32
    %31 = vector.broadcast %cst_16 : f32 to vector<16x64xf32>
    %32 = arith.addf %31, %30 : vector<16x64xf32>
    %33 = arith.divf %31, %32 : vector<16x64xf32>
    %34 = arith.mulf %28, %33 : vector<16x64xf32>
    %35 = arith.truncf %34 : vector<16x64xf32> to vector<16x64xbf16>
    %36 = vector.extract_strided_slice %35 {offsets = [0, 4], sizes = [16, 4], strides = [1, 1]} : vector<16x64xbf16> to vector<16x4xbf16>
    %37 = vector.extract_strided_slice %35 {offsets = [0, 56], sizes = [16, 4], strides = [1, 1]} : vector<16x64xbf16> to vector<16x4xbf16>
    %38 = tpu.concatenate %36, %35, %37 in 1 : vector<16x4xbf16>, vector<16x64xbf16>, vector<16x4xbf16> -> vector<16x72xbf16>
    %39 = vector.extract_strided_slice %38 {offsets = [1, 0], sizes = [1, 72], strides = [1, 1]} : vector<16x72xbf16> to vector<1x72xbf16>
    %40 = vector.extract_strided_slice %38 {offsets = [14, 0], sizes = [1, 72], strides = [1, 1]} : vector<16x72xbf16> to vector<1x72xbf16>
    %41 = tpu.concatenate %39, %38, %40 in 0 : vector<1x72xbf16>, vector<16x72xbf16>, vector<1x72xbf16> -> vector<18x72xbf16>
    %cst_17 = arith.constant 0.000000e+00 : f32
    %42 = vector.broadcast %cst_17 : f32 to vector<16x64xf32>
    %43 = vector.extract_strided_slice %41 {offsets = [0, 0], sizes = [16, 72], strides = [1, 1]} : vector<18x72xbf16> to vector<16x72xbf16>
    %c0_18 = arith.constant 0 : index
    %c0_19 = arith.constant 0 : index
    %c0_20 = arith.constant 0 : index
    %44 = vector.load %arg3[%c0_18, %c0_19, %c0_20] : memref<3x72x64xbf16, #tpu.memory_space<vmem>>, vector<1x72x64xbf16>
    %45 = vector.shape_cast %44 : vector<1x72x64xbf16> to vector<72x64xbf16>
    %cst_21 = arith.constant dense<0.000000e+00> : vector<16x64xf32>
    %46 = tpu.matmul %43, %45, %cst_21 {dimension_numbers = #tpu.dot_dimension_numbers<[1], [0], [0], [1], [0, 0, 1, 1], [], []>} : vector<16x72xbf16>, vector<72x64xbf16>, vector<16x64xf32> -> vector<16x64xf32>
    %47 = arith.addf %42, %46 : vector<16x64xf32>
    %48 = vector.extract_strided_slice %41 {offsets = [1, 0], sizes = [16, 72], strides = [1, 1]} : vector<18x72xbf16> to vector<16x72xbf16>
    %c1_22 = arith.constant 1 : index
    %c0_23 = arith.constant 0 : index
    %c0_24 = arith.constant 0 : index
    %49 = vector.load %arg3[%c1_22, %c0_23, %c0_24] : memref<3x72x64xbf16, #tpu.memory_space<vmem>>, vector<1x72x64xbf16>
    %50 = vector.shape_cast %49 : vector<1x72x64xbf16> to vector<72x64xbf16>
    %cst_25 = arith.constant dense<0.000000e+00> : vector<16x64xf32>
    %51 = tpu.matmul %48, %50, %cst_25 {dimension_numbers = #tpu.dot_dimension_numbers<[1], [0], [0], [1], [0, 0, 1, 1], [], []>} : vector<16x72xbf16>, vector<72x64xbf16>, vector<16x64xf32> -> vector<16x64xf32>
    %52 = arith.addf %47, %51 : vector<16x64xf32>
    %53 = vector.extract_strided_slice %41 {offsets = [2, 0], sizes = [16, 72], strides = [1, 1]} : vector<18x72xbf16> to vector<16x72xbf16>
    %c2_26 = arith.constant 2 : index
    %c0_27 = arith.constant 0 : index
    %c0_28 = arith.constant 0 : index
    %54 = vector.load %arg3[%c2_26, %c0_27, %c0_28] : memref<3x72x64xbf16, #tpu.memory_space<vmem>>, vector<1x72x64xbf16>
    %55 = vector.shape_cast %54 : vector<1x72x64xbf16> to vector<72x64xbf16>
    %cst_29 = arith.constant dense<0.000000e+00> : vector<16x64xf32>
    %56 = tpu.matmul %53, %55, %cst_29 {dimension_numbers = #tpu.dot_dimension_numbers<[1], [0], [0], [1], [0, 0, 1, 1], [], []>} : vector<16x72xbf16>, vector<72x64xbf16>, vector<16x64xf32> -> vector<16x64xf32>
    %57 = arith.addf %52, %56 : vector<16x64xf32>
    %58 = vector.broadcast %3 : vector<1x64xf32> to vector<16x64xf32>
    %59 = arith.addf %57, %58 : vector<16x64xf32>
    %60 = arith.addf %59, %1 : vector<16x64xf32>
    %c0_30 = arith.constant 0 : index
    %c0_31 = arith.constant 0 : index
    %c0_32 = arith.constant 0 : index
    %61 = vector.load %arg5[%c0_30, %c0_31, %c0_32] : memref<1x16x64xf32, #tpu.memory_space<vmem>>, vector<1x16x64xf32>
    %62 = vector.shape_cast %61 : vector<1x16x64xf32> to vector<16x64xf32>
    %63 = vector.shape_cast %60 : vector<16x64xf32> to vector<1x16x64xf32>
    tpu.vector_store %arg5[%c0_30, %c0_31, %c0_32], %63 {strides = array<i32>} : memref<1x16x64xf32, #tpu.memory_space<vmem>>, vector<1x16x64xf32>,
    return
  }
  func.func @transform_0(%arg0: i32) -> (i32, i32, i32) {
    %c0_i32 = arith.constant 0 : i32
    %c0_i32_0 = arith.constant 0 : i32
    %c0_i32_1 = arith.constant 0 : i32
    return %arg0, %c0_i32, %c0_i32_0 : i32, i32, i32
  }
  func.func @transform_1(%arg0: i32) -> (i32, i32, i32) {
    %c0_i32 = arith.constant 0 : i32
    %c0_i32_0 = arith.constant 0 : i32
    %c0_i32_1 = arith.constant 0 : i32
    %c0_i32_2 = arith.constant 0 : i32
    return %c0_i32, %c0_i32_0, %c0_i32_1 : i32, i32, i32
  }
  func.func @transform_2(%arg0: i32) -> (i32, i32, i32) {
    %c0_i32 = arith.constant 0 : i32
    %c0_i32_0 = arith.constant 0 : i32
    %c0_i32_1 = arith.constant 0 : i32
    %c0_i32_2 = arith.constant 0 : i32
    return %c0_i32, %c0_i32_0, %c0_i32_1 : i32, i32, i32
  }
  func.func @transform_3(%arg0: i32) -> (i32, i32) {
    %c0_i32 = arith.constant 0 : i32
    %c0_i32_0 = arith.constant 0 : i32
    %c0_i32_1 = arith.constant 0 : i32
    return %c0_i32, %c0_i32_0 : i32, i32
  }
  func.func @transform_4(%arg0: i32) -> (i32, i32, i32) {
    %c0_i32 = arith.constant 0 : i32
    %c0_i32_0 = arith.constant 0 : i32
    %c0_i32_1 = arith.constant 0 : i32
    return %arg0, %c0_i32, %c0_i32_0 : i32, i32, i32
  }
}

</mosaic_0001>

<llo_original>
// kernel: tpu_custom_call.1
$region0: #{tpu_custom_call.1}
  #allocation0 [shape = 'u32[]', space=smem, size = 0x4, offset = 0x4, fixed_abs, tag = 'smem constant byte address 0x4 - core index']
  #allocation1 [shape = 'u32[72,128]{1,0:T(1,128)}', space=vmem, size = 0x9000, scoped, tag = 'internal scratch']
  %s0 = inlined_call_operand.vmem [shape: f32[2,16,64], index: 0, kind: input, shape index: {}]
  %s1 = inlined_call_operand.vmem [shape: bf16[3,72,64], index: 1, kind: input, shape index: {}]
  %s2 = inlined_call_operand.vmem [shape: bf16[3,72,64], index: 2, kind: input, shape index: {}]
  %s3 = inlined_call_operand.vmem [shape: f32[2,64], index: 3, kind: input, shape index: {}]
  %s4 = inlined_call_operand.hbm [shape: f32[2,16,64], index: 4, kind: output, shape index: {}]
  %s5 = sld [smem:[#allocation0]]
  $region49: #{tpu_custom_call.1} parent=0
    _
  %s7 = ssub.s32 1, %s5
  %s8 = scalar_select 0, %s7, %s5
  $region1: #{tpu_custom_call.1} parent=0
    #allocation2 [shape = 'u8[16384]{0}', space=vmem, size = 0x4000, scoped, tag = 'output window, operand 0']
    #allocation3 [shape = 's32[2]{0}', space=sflag, size = 0x8, scoped, tag = 'scoped memory for tpu_custom_call.1']
    %9 = vsyncpa [#allocation3], 0
    %s10 = scalar_lea.sflag [#allocation3], 1
    %11 = vsyncpa %s10, 0
    loop: start=0, step=1, limit=4
    $region2: #{tpu_custom_call.1} parent=1 // loop_pre_header
      _
    $region3: #{tpu_custom_call.1} parent=1 // loop_header
      %s13 = sphi 0, %s17
      %p14 = scmp.ge.s32.totalorder %s13, 4
      %s23 = sphi 0, %s25
      %s26 = sphi 0, %s23
      %s27 = sphi 0, %s26
      %s43 = sphi 0, %s27
      %s47 = sphi 0, %s47
      %s49 = sphi 0, %s47
      %s50 = sphi 0, %s49
      %s64 = sphi 0, %s50
      %s68 = sphi 0, %s68
      %s70 = sphi 0, %s68
      %s71 = sphi 0, %s70
      %s85 = sphi 0, %s71
      %s89 = sphi 0, %s89
      %s91 = sphi 0, %s89
      %s92 = sphi 0, %s91
      %s106 = sphi 0, %s92
      %s112 = sphi 0, %s114
      %s115 = sphi 0, %s112
      %s116 = sphi 0, %s115
      %s132 = sphi 0, %s116
    $region4: #{tpu_custom_call.1} parent=1 // loop_header_branch
      %16 = sbr.rel (%p14) target = $region8
    $region5: #{tpu_custom_call.1} parent=1 // loop_body
      %s18 = ssub.s32 %s13, 1
      %s19 = ssub.s32 %s13, 2
      %s20 = sadd.s32 %s13, 1
      %s21 = ssub.s32 %s13, %s20
      %p22 = scmp.eq.s32.totalorder %s21, 0
      %s24 = sadd.s32 %s23, 1
      %s25 = scalar_select %p22, %s23, %s24
      %p28 = pneg %p22
      %p29 = scmp.eq.s32.totalorder %s13, 1
      %p30 = por %p28, %p29
      %p31 = scmp.ne.s32.totalorder %s23, %s26
      %p32 = scmp.eq.s32.totalorder %s13, 0
      %p33 = por %p31, %p32
      %p34 = scmp.ne.s32.totalorder %s23, %s26
      %p35 = scmp.eq.s32.totalorder %s18, 1
      %p36 = por %p34, %p35
      %p37 = scmp.ne.s32.totalorder %s26, %s27
      %p38 = scmp.eq.s32.totalorder %s18, 0
      %p39 = por %p37, %p38
      %p40 = scmp.ne.s32.totalorder %s26, %s27
      %p41 = scmp.eq.s32.totalorder %s19, 1
      %p42 = por %p40, %p41
      %p44 = scmp.ne.s32.totalorder %s27, %s43
      %p45 = scmp.eq.s32.totalorder %s19, 0
      %p46 = por %p44, %p45
      %s48 = sadd.s32 %s47, 1
      %p51 = scmp.eq.s32.totalorder %s13, 1
      %p52 = scmp.ne.s32.totalorder %s47, %s49
      %p53 = scmp.eq.s32.totalorder %s13, 0
      %p54 = por %p52, %p53
      %p55 = scmp.ne.s32.totalorder %s47, %s49
      %p56 = scmp.eq.s32.totalorder %s18, 1
      %p57 = por %p55, %p56
      %p58 = scmp.ne.s32.totalorder %s49, %s50
      %p59 = scmp.eq.s32.totalorder %s18, 0
      %p60 = por %p58, %p59
      %p61 = scmp.ne.s32.totalorder %s49, %s50
      %p62 = scmp.eq.s32.totalorder %s19, 1
      %p63 = por %p61, %p62
      %p65 = scmp.ne.s32.totalorder %s50, %s64
      %p66 = scmp.eq.s32.totalorder %s19, 0
      %p67 = por %p65, %p66
      %s69 = sadd.s32 %s68, 1
      %p72 = scmp.eq.s32.totalorder %s13, 1
      %p73 = scmp.ne.s32.totalorder %s68, %s70
      %p74 = scmp.eq.s32.totalorder %s13, 0
      %p75 = por %p73, %p74
      %p76 = scmp.ne.s32.totalorder %s68, %s70
      %p77 = scmp.eq.s32.totalorder %s18, 1
      %p78 = por %p76, %p77
      %p79 = scmp.ne.s32.totalorder %s70, %s71
      %p80 = scmp.eq.s32.totalorder %s18, 0
      %p81 = por %p79, %p80
      %p82 = scmp.ne.s32.totalorder %s70, %s71
      %p83 = scmp.eq.s32.totalorder %s19, 1
      %p84 = por %p82, %p83
      %p86 = scmp.ne.s32.totalorder %s71, %s85
      %p87 = scmp.eq.s32.totalorder %s19, 0
      %p88 = por %p86, %p87
      %s90 = sadd.s32 %s89, 1
      %p93 = scmp.eq.s32.totalorder %s13, 1
      %p94 = scmp.ne.s32.totalorder %s89, %s91
      %p95 = scmp.eq.s32.totalorder %s13, 0
      %p96 = por %p94, %p95
      %p97 = scmp.ne.s32.totalorder %s89, %s91
      %p98 = scmp.eq.s32.totalorder %s18, 1
      %p99 = por %p97, %p98
      %p100 = scmp.ne.s32.totalorder %s91, %s92
      %p101 = scmp.eq.s32.totalorder %s18, 0
      %p102 = por %p100, %p101
      %p103 = scmp.ne.s32.totalorder %s91, %s92
      %p104 = scmp.eq.s32.totalorder %s19, 1
      %p105 = por %p103, %p104
      %p107 = scmp.ne.s32.totalorder %s92, %s106
      %p108 = scmp.eq.s32.totalorder %s19, 0
      %p109 = por %p107, %p108
      %s110 = ssub.s32 %s13, %s20
      %p111 = scmp.eq.s32.totalorder %s110, 0
      %s113 = sadd.s32 %s112, 1
      %s114 = scalar_select %p111, %s112, %s113
      %p117 = pneg %p111
      %p118 = scmp.eq.s32.totalorder %s13, 1
      %p119 = por %p117, %p118
      %p120 = scmp.ne.s32.totalorder %s112, %s115
      %p121 = scmp.eq.s32.totalorder %s13, 0
      %p122 = por %p120, %p121
      %p123 = scmp.ne.s32.totalorder %s112, %s115
      %p124 = scmp.eq.s32.totalorder %s18, 1
      %p125 = por %p123, %p124
      %p126 = scmp.ne.s32.totalorder %s115, %s116
      %p127 = scmp.eq.s32.totalorder %s18, 0
      %p128 = por %p126, %p127
      %p129 = scmp.ne.s32.totalorder %s115, %s116
      %p130 = scmp.eq.s32.totalorder %s19, 1
      %p131 = por %p129, %p130
      %p133 = scmp.ne.s32.totalorder %s116, %s132
      %p134 = scmp.eq.s32.totalorder %s19, 0
      %p135 = por %p133, %p134
      %p136 = scmp.le.s32.totalorder 1, %s13
      %p137 = scmp.lt.s32.totalorder %s13, 3
      %p138 = pnand %p136, %p137
      %p139 = pneg %p138
      // Predicated region
      $region9: #{tpu_custom_call.1} parent=5 // pred_check
        _
      $region10: #{tpu_custom_call.1} parent=5 // pred_check_branch
        %141 = sbr.rel (%p138) target = $region12
      $region11: #{tpu_custom_call.1} parent=5 // pred_region
        %s142 = ssub.s32 %s13, 1
        // Predicated region
        $region13: #{tpu_custom_call.1} parent=11 // pred_check
          %p143 = pneg %p60
        $region14: #{tpu_custom_call.1} parent=11 // pred_check_branch
          %145 = sbr.rel (%p143) target = $region16
        $region15: #{tpu_custom_call.1} parent=11 // pred_region
          _
        $region16: #{tpu_custom_call.1} parent=11 // pred_fallthru
          _
        // Predicated region
        $region17: #{tpu_custom_call.1} parent=11 // pred_check
          %p146 = pneg %p81
        $region18: #{tpu_custom_call.1} parent=11 // pred_check_branch
          %148 = sbr.rel (%p146) target = $region20
        $region19: #{tpu_custom_call.1} parent=11 // pred_region
          _
        $region20: #{tpu_custom_call.1} parent=11 // pred_fallthru
          _
        // Predicated region
        $region21: #{tpu_custom_call.1} parent=11 // pred_check
          %p149 = pneg %p102
        $region22: #{tpu_custom_call.1} parent=11 // pred_check_branch
          %151 = sbr.rel (%p149) target = $region24
        $region23: #{tpu_custom_call.1} parent=11 // pred_region
          _
        $region24: #{tpu_custom_call.1} parent=11 // pred_fallthru
          _
      $region12: #{tpu_custom_call.1} parent=5 // pred_fallthru
        _
      %p152 = scmp.lt.s32.totalorder %s13, 2
      // Predicated region
      $region25: #{tpu_custom_call.1} parent=5 // pred_check
        %p153 = pneg %p152
      $region26: #{tpu_custom_call.1} parent=5 // pred_check_branch
        %155 = sbr.rel (%p153) target = $region28
      $region27: #{tpu_custom_call.1} parent=5 // pred_region
        // Predicated region
        $region29: #{tpu_custom_call.1} parent=27 // pred_check
          %p156 = pneg %p33
        $region30: #{tpu_custom_call.1} parent=27 // pred_check_branch
          %158 = sbr.rel (%p156) target = $region32
        $region31: #{tpu_custom_call.1} parent=27 // pred_region
          %p159 = scmp.lt.s32.totalorder %s13, 1
          %s160 = scalar_select %p159, %s13, 1
          %s161 = smul.addr %s160, 2
          %s162 = smul.addr %s161, 8
          %s163 = scalar_lea.vmem %s0, %s162
        $region32: #{tpu_custom_call.1} parent=27 // pred_fallthru
          _
      $region28: #{tpu_custom_call.1} parent=5 // pred_fallthru
        _
      %p164 = scmp.le.s32.totalorder 1, %s13
      %p165 = scmp.lt.s32.totalorder %s13, 3
      %p166 = pnand %p164, %p165
      %p167 = pneg %p166
      // Predicated region
      $region33: #{tpu_custom_call.1} parent=5 // pred_check
        _
      $region34: #{tpu_custom_call.1} parent=5 // pred_check_branch
        %169 = sbr.rel (%p166) target = $region36
      $region35: #{tpu_custom_call.1} parent=5 // pred_region
        %s170 = ssub.s32 %s13, 1
        %p171 = scmp.lt.s32.totalorder %s18, 1
        %s172 = scalar_select %p171, %s18, 1
        %s173 = smul.addr %s172, 2
        %s174 = smul.addr %s173, 8
        %s175 = scalar_lea.vmem %s0, %s174
        %p176 = pneg %p39
        %p177 = pneg %p36
        %p178 = pneg %p60
        %p179 = pneg %p57
        %p180 = pneg %p81
        %p181 = pneg %p78
        %p182 = pneg %p102
        %p183 = pneg %p99
        %p184 = pneg %p128
        %p185 = pneg %p125
        %s186 = sand.u32 %s115, 1
        %s187 = scalar_lea.sflag [#allocation3], %s186
        %s188 = sand.u32 %s115, 1
        %s189 = smul.addr %s188, 16
        %s190 = scalar_lea.vmem [#allocation2], %s189
        %p191 = scmp.lt.s32.totalorder %s18, 1
        %s192 = scalar_select %p191, %s18, 1
        %s193 = smul.addr %s192, 2
        %s194 = smul.addr %s193, 8
        %s195 = scalar_lea.vmem %s0, %s194
        %v197 = vld [vmem:[%s195] sm:$0xff]
        %v198 = vld [vmem:[%s195 + $0x8] sm:$0xff]
        %v199 = vld [vmem:[%s3] sm:$0x1]
        %v200 = vld [vmem:[%s3 + $0x1] sm:$0x1]
        %v201 = vpack.c.bf16 %v197, %v197
        %v202 = vpack.c.bf16 %v198, %v198
        %v205 = vunpack.c.l.b16 %v201
        %v206 = vunpack.c.l.b16 %v202
        %v207 = vpack.c.b16 %v206, %v205
        %208 = vrot.lane.b32.xlu0 %v207, 124
        %v209 = vpop.permute.xlu0 %208
        %210 = vrot.lane.b32.xlu0 %v207, 4
        %v211 = vpop.permute.xlu0 %210
        %212 = vrot.lane.b32.xlu0 %v207, 12
        %v213 = vpop.permute.xlu0 %212
        %vm214 = vcmask 31744
        %v217 = vsel %vm214, %v209, %v211
        %vm218 = vcmask 556032
        %v220 = vsel %vm218, %v217, %v213
        %v221 = vshrl.u32 %v220, 16
        %v224 = vrot.slane %v221, 7
        %v225 = vshll.u32 %v220, 16
        %v227 = vor.u32 %v224, %v225
        %v230 = vrot.slane %v225, 7
        %vm232 = vcmask 1040384
        %vm233 = vsmask.f32 256
        %vm234 = vmand %vm232, %vm233
        %v235 = vsel %vm234, %v221, %v227
        %v236 = vsel %vm234, %v224, %v230
        %v237 = vld [vmem:[%s1] sm:$0xf]
        %v238 = vld [vmem:[%s1 + $0x4] sm:$0xf]
        %v239 = vld [vmem:[%s1 + $0x8] sm:$0xf]
        %v240 = vld [vmem:[%s1 + $0xc] sm:$0xf]
        %v241 = vld [vmem:[%s1 + $0x10] sm:$0xf]
        %v242 = vld [vmem:[%s1 + $0x14] sm:$0xf]
        %v243 = vld [vmem:[%s1 + $0x18] sm:$0xf]
        %v244 = vld [vmem:[%s1 + $0x1c] sm:$0xf]
        %v245 = vld [vmem:[%s1 + $0x20] sm:$0xf]
        %s246 = scalar_lea.vmem %s1, 36
        %v247 = vld [vmem:[%s246] sm:$0xf]
        %v248 = vld [vmem:[%s246 + $0x4] sm:$0xf]
        %v249 = vld [vmem:[%s246 + $0x8] sm:$0xf]
        %v250 = vld [vmem:[%s246 + $0xc] sm:$0xf]
        %v251 = vld [vmem:[%s246 + $0x10] sm:$0xf]
        %v252 = vld [vmem:[%s246 + $0x14] sm:$0xf]
        %v253 = vld [vmem:[%s246 + $0x18] sm:$0xf]
        %v254 = vld [vmem:[%s246 + $0x1c] sm:$0xf]
        %v255 = vld [vmem:[%s246 + $0x20] sm:$0xf]
        %vm256 = vsmask.f32 7424
        %v258 = vshrl.u32 %v235, 16
        %v260 = vshll.u32 %v235, 16
        %v262 = vrot.slane %v260, 1
        %v263 = vor.u32 %v258, %v262
        %v265 = vshll.u32 %v236, 16
        %v267 = vrot.slane %v265, 1
        %v268 = vsel %vm256, %v263, %v267
        %v278 = vunpack.c.l.b16 %v247
        %v279 = vunpack.c.l.b16 %v248
        %v280 = vunpack.c.l.b16 %v249
        %v281 = vunpack.c.l.b16 %v250
        %v282 = vunpack.c.l.b16 %v251
        %v283 = vunpack.c.l.b16 %v252
        %v284 = vunpack.c.l.b16 %v253
        %v285 = vunpack.c.l.b16 %v254
        %v286 = vunpack.c.l.b16 %v255
        %v287 = vpack.c.b16 %v279, %v278
        %v288 = vpack.c.b16 %v281, %v280
        %v289 = vpack.c.b16 %v283, %v282
        %v290 = vpack.c.b16 %v285, %v284
        %v291 = vpack.c.b16 %v286, %v286
        %vm296 = vcmask 588800
        %v298 = vsel %vm296, %v268, 0
        %vm300 = vcmask 1043456
        %v302 = vsel %vm300, %v291, 0
        %304 = vmatpush.bf16.msra.mxu0 0
        %305 = vmatpush.bf16.msra.mxu0 0
        %306 = vmatpush.bf16.msra.mxu0 0
        %307 = vmatpush.bf16.msra.mxu0 %v302
        %308 = vmatpush.bf16.msra.mxu0 %v290
        %309 = vmatpush.bf16.msra.mxu0 %v289
        %310 = vmatpush.bf16.msra.mxu0 %v288
        %311 = vmatpush.bf16.msra.mxu0 %v287
        %312 = vmatmul.bf16.gmra.mxu0 %v298
        %v313 = vpop.f32.mrf.mxu0
        %v314 = vadd.f32 0.0, %v313
        %v315 = vpop.f32.mrf.mxu0
        %v316 = vadd.f32 0.0, %v315
        %317 = vdwg.mxu0
        %v327 = vunpack.c.l.b16 %v237
        %v328 = vunpack.c.l.b16 %v238
        %v329 = vunpack.c.l.b16 %v239
        %v330 = vunpack.c.l.b16 %v240
        %v331 = vunpack.c.l.b16 %v241
        %v332 = vunpack.c.l.b16 %v242
        %v333 = vunpack.c.l.b16 %v243
        %v334 = vunpack.c.l.b16 %v244
        %v335 = vunpack.c.l.b16 %v245
        %v336 = vpack.c.b16 %v328, %v327
        %v337 = vpack.c.b16 %v330, %v329
        %v338 = vpack.c.b16 %v332, %v331
        %v339 = vpack.c.b16 %v334, %v333
        %v340 = vpack.c.b16 %v335, %v335
        %v345 = vsel %vm296, %v235, 0
        %v348 = vsel %vm300, %v340, 0
        %350 = vmatpush.bf16.msra.mxu0 0
        %351 = vmatpush.bf16.msra.mxu0 0
        %352 = vmatpush.bf16.msra.mxu0 0
        %353 = vmatpush.bf16.msra.mxu0 %v348
        %354 = vmatpush.bf16.msra.mxu0 %v339
        %355 = vmatpush.bf16.msra.mxu0 %v338
        %356 = vmatpush.bf16.msra.mxu0 %v337
        %357 = vmatpush.bf16.msra.mxu0 %v336
        %358 = vmatmul.bf16.gmra.mxu0 %v345
        %v359 = vpop.f32.mrf.mxu0
        %v360 = vadd.f32 %v314, %v359
        %v361 = vpop.f32.mrf.mxu0
        %v362 = vadd.f32 %v316, %v361
        %363 = vdwg.mxu0
        %s364 = scalar_lea.vmem %s1, 72
        %v365 = vld [vmem:[%s364] sm:$0xf]
        %v366 = vld [vmem:[%s364 + $0x4] sm:$0xf]
        %v367 = vld [vmem:[%s364 + $0x8] sm:$0xf]
        %v368 = vld [vmem:[%s364 + $0xc] sm:$0xf]
        %v369 = vld [vmem:[%s364 + $0x10] sm:$0xf]
        %v370 = vld [vmem:[%s364 + $0x14] sm:$0xf]
        %v371 = vld [vmem:[%s364 + $0x18] sm:$0xf]
        %v372 = vld [vmem:[%s364 + $0x1c] sm:$0xf]
        %v373 = vld [vmem:[%s364 + $0x20] sm:$0xf]
        %vm376 = vcmask 1046528
        %v377 = vrot.slane %v235, 1
        %v378 = vrot.slane %v236, 1
        %v379 = vsel %vm376, %v377, %v378
        %v389 = vunpack.c.l.b16 %v365
        %v390 = vunpack.c.l.b16 %v366
        %v391 = vunpack.c.l.b16 %v367
        %v392 = vunpack.c.l.b16 %v368
        %v393 = vunpack.c.l.b16 %v369
        %v394 = vunpack.c.l.b16 %v370
        %v395 = vunpack.c.l.b16 %v371
        %v396 = vunpack.c.l.b16 %v372
        %v397 = vunpack.c.l.b16 %v373
        %v398 = vpack.c.b16 %v390, %v389
        %v399 = vpack.c.b16 %v392, %v391
        %v400 = vpack.c.b16 %v394, %v393
        %v401 = vpack.c.b16 %v396, %v395
        %v402 = vpack.c.b16 %v397, %v397
        %v408 = vsel %vm296, %v379, 0
        %v411 = vsel %vm300, %v402, 0
        %413 = vmatpush.bf16.msra.mxu0 0
        %414 = vmatpush.bf16.msra.mxu0 0
        %415 = vmatpush.bf16.msra.mxu0 0
        %416 = vmatpush.bf16.msra.mxu0 %v411
        %417 = vmatpush.bf16.msra.mxu0 %v401
        %418 = vmatpush.bf16.msra.mxu0 %v400
        %419 = vmatpush.bf16.msra.mxu0 %v399
        %420 = vmatpush.bf16.msra.mxu0 %v398
        %421 = vmatmul.bf16.gmra.mxu0 %v408
        %v422 = vpop.f32.mrf.mxu0
        %v423 = vadd.f32 0.0, %v422
        %v424 = vpop.f32.mrf.mxu0
        %v425 = vadd.f32 0.0, %v424
        %426 = vdwg.mxu0
        %v427 = vadd.f32 %v360, %v423
        %v428 = vadd.f32 %v362, %v425
        %v429 = vperm.slane %v199, 0
        %v430 = vadd.f32 %v427, %v429
        %v431 = vadd.f32 %v428, %v429
        %v432 = vxor.u32 %v430, 2147483648
        %v433 = vxor.u32 %v431, 2147483648
        %v434 = vmul.f32 %v432, 1.442695
        %v435 = vpow.pop %v434
        %v436 = vmul.f32 %v433, 1.442695
        %v437 = vpow.pop %v436
        %v438 = vadd.f32 %v435, 1.0
        %v439 = vadd.f32 %v437, 1.0
        %v440 = vrcp.pop %v438
        %v441 = vmul.f32 %v438, %v440
        %v442 = vsub.f32 1.0, %v441
        %v443 = vmul.f32 %v440, %v442
        %v444 = vadd.f32 %v440, %v443
        %vm445 = vweird.f32 %v438
        %vm446 = vweird.f32 %v440
        %vm447 = vmor %vm445, %vm446
        %v448 = vsel %vm447, %v440, %v444
        %v449 = vand.u32 2147483647, %v438
        %vm450 = vcmp.eq.f32.partialorder %v449, 8.507059e+37
        %v451 = vand.u32 %v438, 2147483648
        %v452 = vor.u32 1.1754944e-38, %v451
        %v453 = vsel %vm450, %v452, %v448
        %v454 = vmul.f32 1.0, %v453
        %v455 = vrcp.pop %v439
        %v456 = vmul.f32 %v439, %v455
        %v457 = vsub.f32 1.0, %v456
        %v458 = vmul.f32 %v455, %v457
        %v459 = vadd.f32 %v455, %v458
        %vm460 = vweird.f32 %v439
        %vm461 = vweird.f32 %v455
        %vm462 = vmor %vm460, %vm461
        %v463 = vsel %vm462, %v455, %v459
        %v464 = vand.u32 2147483647, %v439
        %vm465 = vcmp.eq.f32.partialorder %v464, 8.507059e+37
        %v466 = vand.u32 %v439, 2147483648
        %v467 = vor.u32 1.1754944e-38, %v466
        %v468 = vsel %vm465, %v467, %v463
        %v469 = vmul.f32 1.0, %v468
        %v470 = vmul.f32 %v430, %v454
        %v471 = vmul.f32 %v431, %v469
        %v472 = vpack.c.bf16 %v470, %v470
        %v473 = vpack.c.bf16 %v471, %v471
        %v476 = vunpack.c.l.b16 %v472
        %v477 = vunpack.c.l.b16 %v473
        %v478 = vpack.c.b16 %v477, %v476
        %479 = vrot.lane.b32.xlu0 %v478, 124
        %v480 = vpop.permute.xlu0 %479
        %481 = vrot.lane.b32.xlu0 %v478, 4
        %v482 = vpop.permute.xlu0 %481
        %483 = vrot.lane.b32.xlu0 %v478, 12
        %v484 = vpop.permute.xlu0 %483
        %v487 = vsel %vm214, %v480, %v482
        %v489 = vsel %vm218, %v487, %v484
        %v490 = vshrl.u32 %v489, 16
        %v493 = vrot.slane %v490, 7
        %v494 = vshll.u32 %v489, 16
        %v496 = vor.u32 %v493, %v494
        %v499 = vrot.slane %v494, 7
        %v501 = vsel %vm234, %v490, %v496
        %v502 = vsel %vm234, %v493, %v499
        %v503 = vld [vmem:[%s2] sm:$0xf]
        %v504 = vld [vmem:[%s2 + $0x4] sm:$0xf]
        %v505 = vld [vmem:[%s2 + $0x8] sm:$0xf]
        %v506 = vld [vmem:[%s2 + $0xc] sm:$0xf]
        %v507 = vld [vmem:[%s2 + $0x10] sm:$0xf]
        %v508 = vld [vmem:[%s2 + $0x14] sm:$0xf]
        %v509 = vld [vmem:[%s2 + $0x18] sm:$0xf]
        %v510 = vld [vmem:[%s2 + $0x1c] sm:$0xf]
        %v511 = vld [vmem:[%s2 + $0x20] sm:$0xf]
        %s512 = scalar_lea.vmem %s2, 36
        %v513 = vld [vmem:[%s512] sm:$0xf]
        %v514 = vld [vmem:[%s512 + $0x4] sm:$0xf]
        %v515 = vld [vmem:[%s512 + $0x8] sm:$0xf]
        %v516 = vld [vmem:[%s512 + $0xc] sm:$0xf]
        %v517 = vld [vmem:[%s512 + $0x10] sm:$0xf]
        %v518 = vld [vmem:[%s512 + $0x14] sm:$0xf]
        %v519 = vld [vmem:[%s512 + $0x18] sm:$0xf]
        %v520 = vld [vmem:[%s512 + $0x1c] sm:$0xf]
        %v521 = vld [vmem:[%s512 + $0x20] sm:$0xf]
        %v523 = vshrl.u32 %v501, 16
        %v525 = vshll.u32 %v501, 16
        %v527 = vrot.slane %v525, 1
        %v528 = vor.u32 %v523, %v527
        %v530 = vshll.u32 %v502, 16
        %v532 = vrot.slane %v530, 1
        %v533 = vsel %vm256, %v528, %v532
        %v543 = vunpack.c.l.b16 %v513
        %v544 = vunpack.c.l.b16 %v514
        %v545 = vunpack.c.l.b16 %v515
        %v546 = vunpack.c.l.b16 %v516
        %v547 = vunpack.c.l.b16 %v517
        %v548 = vunpack.c.l.b16 %v518
        %v549 = vunpack.c.l.b16 %v519
        %v550 = vunpack.c.l.b16 %v520
        %v551 = vunpack.c.l.b16 %v521
        %v552 = vpack.c.b16 %v544, %v543
        %v553 = vpack.c.b16 %v546, %v545
        %v554 = vpack.c.b16 %v548, %v547
        %v555 = vpack.c.b16 %v550, %v549
        %v556 = vpack.c.b16 %v551, %v551
        %v562 = vsel %vm296, %v533, 0
        %v565 = vsel %vm300, %v556, 0
        %567 = vmatpush.bf16.msra.mxu0 0
        %568 = vmatpush.bf16.msra.mxu0 0
        %569 = vmatpush.bf16.msra.mxu0 0
        %570 = vmatpush.bf16.msra.mxu0 %v565
        %571 = vmatpush.bf16.msra.mxu0 %v555
        %572 = vmatpush.bf16.msra.mxu0 %v554
        %573 = vmatpush.bf16.msra.mxu0 %v553
        %574 = vmatpush.bf16.msra.mxu0 %v552
        %575 = vmatmul.bf16.gmra.mxu0 %v562
        %v576 = vpop.f32.mrf.mxu0
        %v577 = vadd.f32 0.0, %v576
        %v578 = vpop.f32.mrf.mxu0
        %v579 = vadd.f32 0.0, %v578
        %580 = vdwg.mxu0
        %v590 = vunpack.c.l.b16 %v503
        %v591 = vunpack.c.l.b16 %v504
        %v592 = vunpack.c.l.b16 %v505
        %v593 = vunpack.c.l.b16 %v506
        %v594 = vunpack.c.l.b16 %v507
        %v595 = vunpack.c.l.b16 %v508
        %v596 = vunpack.c.l.b16 %v509
        %v597 = vunpack.c.l.b16 %v510
        %v598 = vunpack.c.l.b16 %v511
        %v599 = vpack.c.b16 %v591, %v590
        %v600 = vpack.c.b16 %v593, %v592
        %v601 = vpack.c.b16 %v595, %v594
        %v602 = vpack.c.b16 %v597, %v596
        %v603 = vpack.c.b16 %v598, %v598
        %v608 = vsel %vm296, %v501, 0
        %v611 = vsel %vm300, %v603, 0
        %613 = vmatpush.bf16.msra.mxu0 0
        %614 = vmatpush.bf16.msra.mxu0 0
        %615 = vmatpush.bf16.msra.mxu0 0
        %616 = vmatpush.bf16.msra.mxu0 %v611
        %617 = vmatpush.bf16.msra.mxu0 %v602
        %618 = vmatpush.bf16.msra.mxu0 %v601
        %619 = vmatpush.bf16.msra.mxu0 %v600
        %620 = vmatpush.bf16.msra.mxu0 %v599
        %621 = vmatmul.bf16.gmra.mxu0 %v608
        %v622 = vpop.f32.mrf.mxu0
        %v623 = vadd.f32 %v577, %v622
        %v624 = vpop.f32.mrf.mxu0
        %v625 = vadd.f32 %v579, %v624
        %626 = vdwg.mxu0
        %s627 = scalar_lea.vmem %s2, 72
        %v628 = vld [vmem:[%s627] sm:$0xf]
        %v629 = vld [vmem:[%s627 + $0x4] sm:$0xf]
        %v630 = vld [vmem:[%s627 + $0x8] sm:$0xf]
        %v631 = vld [vmem:[%s627 + $0xc] sm:$0xf]
        %v632 = vld [vmem:[%s627 + $0x10] sm:$0xf]
        %v633 = vld [vmem:[%s627 + $0x14] sm:$0xf]
        %v634 = vld [vmem:[%s627 + $0x18] sm:$0xf]
        %v635 = vld [vmem:[%s627 + $0x1c] sm:$0xf]
        %v636 = vld [vmem:[%s627 + $0x20] sm:$0xf]
        %v639 = vrot.slane %v501, 1
        %v640 = vrot.slane %v502, 1
        %v641 = vsel %vm376, %v639, %v640
        %v651 = vunpack.c.l.b16 %v628
        %v652 = vunpack.c.l.b16 %v629
        %v653 = vunpack.c.l.b16 %v630
        %v654 = vunpack.c.l.b16 %v631
        %v655 = vunpack.c.l.b16 %v632
        %v656 = vunpack.c.l.b16 %v633
        %v657 = vunpack.c.l.b16 %v634
        %v658 = vunpack.c.l.b16 %v635
        %v659 = vunpack.c.l.b16 %v636
        %v660 = vpack.c.b16 %v652, %v651
        %v661 = vpack.c.b16 %v654, %v653
        %v662 = vpack.c.b16 %v656, %v655
        %v663 = vpack.c.b16 %v658, %v657
        %v664 = vpack.c.b16 %v659, %v659
        %v670 = vsel %vm296, %v641, 0
        %v673 = vsel %vm300, %v664, 0
        %675 = vmatpush.bf16.msra.mxu0 0
        %676 = vmatpush.bf16.msra.mxu0 0
        %677 = vmatpush.bf16.msra.mxu0 0
        %678 = vmatpush.bf16.msra.mxu0 %v673
        %679 = vmatpush.bf16.msra.mxu0 %v663
        %680 = vmatpush.bf16.msra.mxu0 %v662
        %681 = vmatpush.bf16.msra.mxu0 %v661
        %682 = vmatpush.bf16.msra.mxu0 %v660
        %683 = vmatmul.bf16.gmra.mxu0 %v670
        %v684 = vpop.f32.mrf.mxu0
        %v685 = vadd.f32 0.0, %v684
        %v686 = vpop.f32.mrf.mxu0
        %v687 = vadd.f32 0.0, %v686
        %688 = vdwg.mxu0
        %v689 = vadd.f32 %v623, %v685
        %v690 = vadd.f32 %v625, %v687
        %v691 = vperm.slane %v200, 0
        %v692 = vadd.f32 %v689, %v691
        %v693 = vadd.f32 %v690, %v691
        %v694 = vadd.f32 %v692, %v197
        %v695 = vadd.f32 %v693, %v198
        %vm696 = vcmask 523264
        %697 = vst.msk [vmem:[%s190] sm:$0xff] %vm696, %v694
        %698 = vst.msk [vmem:[%s190 + $0x8] sm:$0xff] %vm696, %v695
        %s699 = sand.u32 %s115, 1
        %s700 = scalar_lea.sflag [#allocation3], %s699
        %s701 = sand.u32 %s115, 1
        %s702 = smul.addr %s701, 16
        %s703 = scalar_lea.vmem [#allocation2], %s702
        // Predicated region
        $region37: #{tpu_custom_call.1} parent=35 // pred_check
          %p704 = pneg %p125
        $region38: #{tpu_custom_call.1} parent=35 // pred_check_branch
          %706 = sbr.rel (%p704) target = $region40
        $region39: #{tpu_custom_call.1} parent=35 // pred_region
          %708 = vsyncadd %s700, 0
          %s709 = smul.addr %s18, 2
          %s710 = smul.addr %s709, 8
          %s711 = scalar_lea.hbm %s4, %s710
          %s712 = sshll.u32 %s703, 4
          %s713 = int_to_ptr.vmem [resolvable:$true] %s712
          %s714 = sshll.u32 %s711, 4
          %s715 = int_to_ptr.hbm [resolvable:$true] %s714
          %720 = dma.vmem_to_hbm [thread:$0]  %s713, 256, %s715, %s700, 128, 128, 8
        $region40: #{tpu_custom_call.1} parent=35 // pred_fallthru
          _
      $region36: #{tpu_custom_call.1} parent=5 // pred_fallthru
        _
      %p721 = scmp.le.s32.totalorder 2, %s13
      // Predicated region
      $region41: #{tpu_custom_call.1} parent=5 // pred_check
        %p722 = pneg %p721
      $region42: #{tpu_custom_call.1} parent=5 // pred_check_branch
        %724 = sbr.rel (%p722) target = $region44
      $region43: #{tpu_custom_call.1} parent=5 // pred_region
        %s725 = ssub.s32 %s13, 2
        // Predicated region
        $region45: #{tpu_custom_call.1} parent=43 // pred_check
          %p726 = pneg %p131
        $region46: #{tpu_custom_call.1} parent=43 // pred_check_branch
          %728 = sbr.rel (%p726) target = $region48
        $region47: #{tpu_custom_call.1} parent=43 // pred_region
          %s729 = sand.u32 %s116, 1
          %s730 = scalar_lea.sflag [#allocation3], %s729
          %s731 = sand.u32 %s116, 1
          %s732 = smul.addr %s731, 16
          %s733 = scalar_lea.vmem [#allocation2], %s732
          %735 = dma.done %s730, 256
        $region48: #{tpu_custom_call.1} parent=43 // pred_fallthru
          _
      $region44: #{tpu_custom_call.1} parent=5 // pred_fallthru
        _
    $region6: #{tpu_custom_call.1} parent=1 // loop_footer
      %s17 = sadd.s32 1, %s13
    $region7: #{tpu_custom_call.1} parent=1 // loop_footer_branch
      %12 = sbr.rel target = $region3
    $region8: #{tpu_custom_call.1} parent=1 // loop_exit
      _
    %736 = vsyncpa [#allocation3], 1
    %s737 = scalar_lea.sflag [#allocation3], 1
    %738 = vsyncpa %s737, 1

</llo_original>
